<compile_context>
chip_gen: v7x
topology: tpu7x:2x2x1
jax: 0.10.0
libtpu: 0.0.40
codegen_flags: <defaults>
</compile_context>

<pallas_src>
import math
import functools

import jax
import jax.numpy as jnp
from jax.experimental import pallas as pl
from jax.experimental.pallas import tpu as pltpu


# --------------------------------------------------------------------------
# Parameter ("buffer") construction — deterministic, mirrors the PyTorch init.
# --------------------------------------------------------------------------
def make_positional_encoding(d_model: int, max_len: int = 1000, dtype=jnp.float32):
    """Returns pe of shape (max_len, 1, d_model) — same layout as the torch buffer."""
    position = jnp.arange(0, max_len, dtype=jnp.float32)[:, None]               # (L, 1)
    div_term = jnp.exp(
        jnp.arange(0, d_model, 2, dtype=jnp.float32) * (-math.log(10000.0) / d_model)
    )                                                                            # (D/2,)
    pe = jnp.zeros((max_len, d_model), dtype=jnp.float32)
    pe = pe.at[:, 0::2].set(jnp.sin(position * div_term))
    pe = pe.at[:, 1::2].set(jnp.cos(position * div_term))
    # Pre-cast once at init so the hot path never re-casts per call.
    return pe[:, None, :].astype(dtype)                                          # (L, 1, D)


# --------------------------------------------------------------------------
# Kernels  (x/o/bits blocks: (tile_s, B*D);  pe block: (tile_s, D))
# --------------------------------------------------------------------------
def _broadcast_pe(pe_row, batch):
    """(tile_s, D) -> (tile_s, B*D); pure VPU/XLU work hidden under the HBM DMA."""
    if batch == 1:
        return pe_row
    return jnp.concatenate([pe_row] * batch, axis=1)


def _pe_add_kernel(x_ref, pe_ref, o_ref, *, batch, d_model):
    pe_row = pe_ref[...]                                        # (tile_s, D)
    if batch > 1 and d_model % 128 == 0:
        # Lane-aligned per-batch chunks: unmasked stores, no (tile_s, B*D) pe temp.
        for b in range(batch):                                  # static unroll
            sl = slice(b * d_model, (b + 1) * d_model)
            o_ref[:, sl] = x_ref[:, sl] + pe_row
    else:
        # One full-width, lane-dense block store (the big lever for D % 128 != 0).
        o_ref[...] = x_ref[...] + _broadcast_pe(pe_row, batch)


def _pe_add_dropout_kernel(x_ref, pe_ref, bits_ref, o_ref, *,
                           batch, threshold, scale):
    # Inverted dropout: keep decision is one block-wide raw uint32 threshold
    # compare (P(keep) = 1 - p), one scale, one select, one lane-dense store.
    pe_bd = _broadcast_pe(pe_ref[...], batch)                   # (tile_s, B*D)
    y = (x_ref[...] + pe_bd) * scale
    keep = bits_ref[...] >= jnp.uint32(threshold)
    o_ref[...] = jnp.where(keep, y, jnp.zeros_like(y))


# --------------------------------------------------------------------------
# Wrapper helpers
# --------------------------------------------------------------------------
def _round8_down(n):
    return max(8, (n // 8) * 8)


def _round8_up(n):
    return ((n + 7) // 8) * 8


def _generation_defaults():
    """(block_bytes, vmem_clamp) picked by TPU generation (VMEM capacity proxy)."""
    vmem_cap = 128 << 20
    try:
        info = pltpu.get_tpu_info()
        vmem_cap = int(getattr(info, "vmem_capacity_bytes", vmem_cap) or vmem_cap)
    except Exception:
        pass
    if vmem_cap <= (64 << 20):
        # v7x-class: 64 MiB VMEM, ~3.2 TB/s HBM -> big blocks to amortize step cost.
        return 8 << 20, 56 << 20
    # v5e / v6e class: 128 MiB VMEM, 0.8-1.4 TB/s HBM.
    return 4 << 20, 48 << 20


def _choose_tile_s(S, x_row_bytes, total_row_bytes, max_len, block_bytes, vmem_clamp):
    """Rows per block: sublane(8)-aligned, VMEM-budgeted, >=2 grid steps when possible."""
    t_block = block_bytes // max(x_row_bytes, 1)                      # target x-block size
    t_vmem = ((vmem_clamp - (8 << 20)) // 2) // max(total_row_bytes, 1)  # double-buffered
    t = _round8_down(min(t_block, t_vmem))
    t = min(t, _round8_down(max_len))        # every pe block must start inside pe
    t = min(t, _round8_down(S))              # don't exceed (8-aligned) S
    if S >= 16:                              # keep >=2 grid steps (v7x: 2 TensorCores)
        t = min(t, max(8, _round8_up((S + 1) // 2)))
    return max(t, 8)


# --------------------------------------------------------------------------
# Wrapper
# --------------------------------------------------------------------------
def positional_encoder(x, pe, *, dropout_p: float = 0.1, training: bool = False,
                       key=None, block_bytes: int | None = None,
                       donate_x: bool = False):
    """x: (S, B, D);  pe: (max_len, 1, D) or (max_len, D).  Returns (S, B, D)."""
    S, B, D = x.shape
    max_len = pe.shape[0]
    if S > max_len:
        raise ValueError(f"sequence length {S} exceeds positional-encoding max_len {max_len}")

    pe2 = pe.reshape(max_len, -1)                 # (max_len, D)
    if pe2.shape[1] != D:
        raise ValueError("pe d_model does not match x")
    if pe2.dtype != x.dtype:
        pe2 = pe2.astype(x.dtype)                 # cold fallback; prefer casting at init

    p = float(dropout_p)
    use_dropout = training and p > 0.0
    if use_dropout and p >= 1.0:
        return jnp.zeros_like(x)
    if key is None:
        key = jax.random.PRNGKey(0)

    # Tiny-slab fallback: with <128 lanes every store is masked and the call is
    # dominated by launch / per-step fixed overhead; plain XLA fusion is faster.
    if B * D < 128 or S < 8:
        y = x + pe2[:S][:, None, :]
        if use_dropout:
            keep = jax.random.bernoulli(key, 1.0 - p, y.shape)
            y = jnp.where(keep, y * (1.0 / (1.0 - p)), jnp.zeros_like(y))
        return y

    BD = B * D
    x2 = x.reshape(S, BD)                         # free: collapse of the two minor dims
    itemsize = x.dtype.itemsize

    gen_block, vmem_clamp = _generation_defaults()
    if block_bytes is None:
        block_bytes = gen_block

    x_row = BD * itemsize
    total_row = 2 * x_row + D * pe2.dtype.itemsize + (BD * 4 if use_dropout else 0)
    tile_s = _choose_tile_s(S, x_row, total_row, max_len, block_bytes, vmem_clamp)
    grid = (pl.cdiv(S, tile_s),)                  # Pallas handles the partial last block

    x_spec = pl.BlockSpec((tile_s, BD), lambda i: (i, 0))
    pe_spec = pl.BlockSpec((tile_s, D), lambda i: (i, 0))
    o_spec = pl.BlockSpec((tile_s, BD), lambda i: (i, 0))
    out_shape = jax.ShapeDtypeStruct((S, BD), x.dtype)

    # VMEM budget: double-buffered x-in / (bits-in) / x-out blocks + pe + headroom.
    vmem_limit = 2 * tile_s * total_row + (8 << 20)
    vmem_limit = int(min(max(vmem_limit, 16 << 20), vmem_clamp))

    compiler_params = pltpu.CompilerParams(
        dimension_semantics=("parallel",),        # independent tiles (v7x: 2 TensorCores)
        vmem_limit_bytes=vmem_limit,
    )
    alias = dict(input_output_aliases={0: 0}) if donate_x else {}

    if not use_dropout:
        out2 = pl.pallas_call(
            functools.partial(_pe_add_kernel, batch=B, d_model=D),
            out_shape=out_shape,
            grid=grid,
            in_specs=[x_spec, pe_spec],
            out_specs=o_spec,
            compiler_params=compiler_params,
            **alias,
        )(x2, pe2)
        return out2.reshape(S, B, D)

    # ---- training path (dropout active) ----
    threshold = min(int(round(p * (1 << 32))), (1 << 32) - 1)    # P(keep) = 1 - p
    scale = 1.0 / (1.0 - p)
    # TODO(synk): the on-chip PRNG (pltpu.prng_seed / prng_random_bits) would avoid
    # streaming bits from HBM, but it has no interpret/CPU lowering; bits are drawn
    # with jax.random and read as one extra lane-dense input stream.  The mask is
    # semantically equivalent to torch.nn.Dropout but not bit-identical.
    bits = jax.random.bits(key, (S, BD), jnp.uint32)

    out2 = pl.pallas_call(
        functools.partial(_pe_add_dropout_kernel, batch=B,
                          threshold=threshold, scale=scale),
        out_shape=out_shape,
        grid=grid,
        in_specs=[x_spec, pe_spec, x_spec],       # bits: same (tile_s, B*D) tiling as x
        out_specs=o_spec,
        compiler_params=compiler_params,
        **alias,
    )(x2, pe2, bits)
    return out2.reshape(S, B, D)


# --------------------------------------------------------------------------
# Demo / self-check
# --------------------------------------------------------------------------
if __name__ == "__main__":
    S, B, D = 16, 4, 64           # seq_len, batch, d_model (small; B*D >= 128 -> Pallas path)
    MAX_LEN = 1000

    root = jax.random.PRNGKey(0)
    kx, kdrop = jax.random.split(root)
    x = jax.random.normal(kx, (S, B, D), dtype=jnp.float32)
    pe = make_positional_encoding(D, MAX_LEN, dtype=x.dtype)      # (1000, 1, 64)
    ref = x + pe[:S]

    # --- eval mode: dropout is identity -------------------------------------
    out = jax.block_until_ready(positional_encoder(x, pe, dropout_p=0.1, training=False))
    assert out.shape == (S, B, D)
    assert jnp.allclose(out, ref, atol=1e-6), "eval-mode mismatch vs reference"

    # --- training mode: inverted dropout (bits streamed from jax.random) -----
    p = 0.25
    out_tr = jax.block_until_ready(
        positional_encoder(x, pe, dropout_p=p, training=True, key=kdrop))
    # Exact reference: same bits, same threshold rule as the kernel.
    thr = min(int(round(p * (1 << 32))), (1 << 32) - 1)
    bits_ref = jax.random.bits(kdrop, (S, B * D), jnp.uint32).reshape(S, B, D)
    exp_tr = jnp.where(bits_ref >= jnp.uint32(thr), ref * (1.0 / (1.0 - p)),
                       jnp.zeros_like(ref))
    assert jnp.allclose(out_tr, exp_tr, rtol=1e-5, atol=1e-5), "dropout-mode mismatch"
    drop_frac = float(jnp.mean((out_tr == 0.0).astype(jnp.float32)))
    assert 0.1 < drop_frac < 0.4, f"implausible dropout rate {drop_frac}"

    # --- tiny-slab jnp fallback path -----------------------------------------
    xs = jax.random.normal(kx, (4, 2, 32), dtype=jnp.float32)
    outs = jax.block_until_ready(positional_encoder(xs, pe[:, :, :32], training=False))
    assert jnp.allclose(outs, xs + pe[:4, :, :32], atol=1e-6), "fallback mismatch"

    print("KERNEL_OK")
</pallas_src>

<mosaic_0001>
module attributes {stable_mosaic.version = 11 : i64} {
  func.func @_pe_add_kernel(%arg0: i32, %arg1: memref<8x256xf32, #tpu.memory_space<vmem>>, %arg2: memref<8x64xf32, #tpu.memory_space<vmem>>, %arg3: memref<8x256xf32, #tpu.memory_space<vmem>>) attributes {dimension_semantics = [#tpu.dimension_semantics<parallel>], iteration_bounds = array<i64: 2>, scalar_prefetch = 0 : i64, scratch_operands = 0 : i64, tpu.core_type = #tpu.core_type<tc>, window_params = [{transform_indices = @transform_0, window_bounds = array<i64: 8, 256>}, {transform_indices = @transform_1, window_bounds = array<i64: 8, 64>}, {transform_indices = @transform_2, window_bounds = array<i64: 8, 256>}]} {
    %c0 = arith.constant 0 : index
    %c0_0 = arith.constant 0 : index
    %0 = vector.load %arg2[%c0, %c0_0] : memref<8x64xf32, #tpu.memory_space<vmem>>, vector<8x64xf32>
    %c0_1 = arith.constant 0 : index
    %c0_2 = arith.constant 0 : index
    %1 = vector.load %arg1[%c0_1, %c0_2] : memref<8x256xf32, #tpu.memory_space<vmem>>, vector<8x256xf32>
    %2 = tpu.concatenate %0, %0, %0, %0 in 1 : vector<8x64xf32>, vector<8x64xf32>, vector<8x64xf32>, vector<8x64xf32> -> vector<8x256xf32>
    %3 = arith.addf %1, %2 : vector<8x256xf32>
    %c0_3 = arith.constant 0 : index
    %c0_4 = arith.constant 0 : index
    %4 = vector.load %arg3[%c0_3, %c0_4] : memref<8x256xf32, #tpu.memory_space<vmem>>, vector<8x256xf32>
    tpu.vector_store %arg3[%c0_3, %c0_4], %3 {strides = array<i32>} : memref<8x256xf32, #tpu.memory_space<vmem>>, vector<8x256xf32>,
    return
  }
  func.func @transform_0(%arg0: i32) -> (i32, i32) {
    %c0_i32 = arith.constant 0 : i32
    %c0_i32_0 = arith.constant 0 : i32
    return %arg0, %c0_i32 : i32, i32
  }
  func.func @transform_1(%arg0: i32) -> (i32, i32) {
    %c0_i32 = arith.constant 0 : i32
    %c0_i32_0 = arith.constant 0 : i32
    return %arg0, %c0_i32 : i32, i32
  }
  func.func @transform_2(%arg0: i32) -> (i32, i32) {
    %c0_i32 = arith.constant 0 : i32
    %c0_i32_0 = arith.constant 0 : i32
    return %arg0, %c0_i32 : i32, i32
  }
}

</mosaic_0001>

<llo_original>
// kernel: tpu_custom_call.1
$region0: #{tpu_custom_call.1}
  #allocation0 [shape = 'u32[]', space=smem, size = 0x4, offset = 0x4, fixed_abs, tag = 'smem constant byte address 0x4 - core index']
  #allocation1 [shape = 'u32[144,128]{1,0:T(1,128)}', space=vmem, size = 0x12000, scoped, tag = 'internal scratch']
  %s0 = inlined_call_operand.vmem [shape: f32[16,256], index: 0, kind: input, shape index: {}]
  %s1 = inlined_call_operand.vmem [shape: f32[1000,64], index: 1, kind: input, shape index: {}]
  %s2 = inlined_call_operand.hbm [shape: f32[16,256], index: 2, kind: output, shape index: {}]
  %s3 = sld [smem:[#allocation0]]
  $region41: #{tpu_custom_call.1} parent=0
    _
  %s5 = ssub.s32 1, %s3
  %s6 = scalar_select 0, %s5, %s3
  $region1: #{tpu_custom_call.1} parent=0
    #allocation2 [shape = 'u8[16384]{0}', space=vmem, size = 0x4000, scoped, tag = 'output window, operand 0']
    #allocation3 [shape = 's32[2]{0}', space=sflag, size = 0x8, scoped, tag = 'scoped memory for tpu_custom_call.1']
    %7 = vsyncpa [#allocation3], 0
    %s8 = scalar_lea.sflag [#allocation3], 1
    %9 = vsyncpa %s8, 0
    loop: start=0, step=1, limit=4
    $region2: #{tpu_custom_call.1} parent=1 // loop_pre_header
      _
    $region3: #{tpu_custom_call.1} parent=1 // loop_header
      %s11 = sphi 0, %s15
      %p12 = scmp.ge.s32.totalorder %s11, 4
      %s21 = sphi 0, %s23
      %s24 = sphi 0, %s21
      %s25 = sphi 0, %s24
      %s41 = sphi 0, %s25
      %s47 = sphi 0, %s49
      %s50 = sphi 0, %s47
      %s51 = sphi 0, %s50
      %s67 = sphi 0, %s51
      %s73 = sphi 0, %s75
      %s76 = sphi 0, %s73
      %s77 = sphi 0, %s76
      %s93 = sphi 0, %s77
    $region4: #{tpu_custom_call.1} parent=1 // loop_header_branch
      %14 = sbr.rel (%p12) target = $region8
    $region5: #{tpu_custom_call.1} parent=1 // loop_body
      %s16 = ssub.s32 %s11, 1
      %s17 = ssub.s32 %s11, 2
      %s18 = sadd.s32 %s11, 1
      %s19 = ssub.s32 %s11, %s18
      %p20 = scmp.eq.s32.totalorder %s19, 0
      %s22 = sadd.s32 %s21, 1
      %s23 = scalar_select %p20, %s21, %s22
      %p26 = pneg %p20
      %p27 = scmp.eq.s32.totalorder %s11, 1
      %p28 = por %p26, %p27
      %p29 = scmp.ne.s32.totalorder %s21, %s24
      %p30 = scmp.eq.s32.totalorder %s11, 0
      %p31 = por %p29, %p30
      %p32 = scmp.ne.s32.totalorder %s21, %s24
      %p33 = scmp.eq.s32.totalorder %s16, 1
      %p34 = por %p32, %p33
      %p35 = scmp.ne.s32.totalorder %s24, %s25
      %p36 = scmp.eq.s32.totalorder %s16, 0
      %p37 = por %p35, %p36
      %p38 = scmp.ne.s32.totalorder %s24, %s25
      %p39 = scmp.eq.s32.totalorder %s17, 1
      %p40 = por %p38, %p39
      %p42 = scmp.ne.s32.totalorder %s25, %s41
      %p43 = scmp.eq.s32.totalorder %s17, 0
      %p44 = por %p42, %p43
      %s45 = ssub.s32 %s11, %s18
      %p46 = scmp.eq.s32.totalorder %s45, 0
      %s48 = sadd.s32 %s47, 1
      %s49 = scalar_select %p46, %s47, %s48
      %p52 = pneg %p46
      %p53 = scmp.eq.s32.totalorder %s11, 1
      %p54 = por %p52, %p53
      %p55 = scmp.ne.s32.totalorder %s47, %s50
      %p56 = scmp.eq.s32.totalorder %s11, 0
      %p57 = por %p55, %p56
      %p58 = scmp.ne.s32.totalorder %s47, %s50
      %p59 = scmp.eq.s32.totalorder %s16, 1
      %p60 = por %p58, %p59
      %p61 = scmp.ne.s32.totalorder %s50, %s51
      %p62 = scmp.eq.s32.totalorder %s16, 0
      %p63 = por %p61, %p62
      %p64 = scmp.ne.s32.totalorder %s50, %s51
      %p65 = scmp.eq.s32.totalorder %s17, 1
      %p66 = por %p64, %p65
      %p68 = scmp.ne.s32.totalorder %s51, %s67
      %p69 = scmp.eq.s32.totalorder %s17, 0
      %p70 = por %p68, %p69
      %s71 = ssub.s32 %s11, %s18
      %p72 = scmp.eq.s32.totalorder %s71, 0
      %s74 = sadd.s32 %s73, 1
      %s75 = scalar_select %p72, %s73, %s74
      %p78 = pneg %p72
      %p79 = scmp.eq.s32.totalorder %s11, 1
      %p80 = por %p78, %p79
      %p81 = scmp.ne.s32.totalorder %s73, %s76
      %p82 = scmp.eq.s32.totalorder %s11, 0
      %p83 = por %p81, %p82
      %p84 = scmp.ne.s32.totalorder %s73, %s76
      %p85 = scmp.eq.s32.totalorder %s16, 1
      %p86 = por %p84, %p85
      %p87 = scmp.ne.s32.totalorder %s76, %s77
      %p88 = scmp.eq.s32.totalorder %s16, 0
      %p89 = por %p87, %p88
      %p90 = scmp.ne.s32.totalorder %s76, %s77
      %p91 = scmp.eq.s32.totalorder %s17, 1
      %p92 = por %p90, %p91
      %p94 = scmp.ne.s32.totalorder %s77, %s93
      %p95 = scmp.eq.s32.totalorder %s17, 0
      %p96 = por %p94, %p95
      %p97 = scmp.le.s32.totalorder 1, %s11
      %p98 = scmp.lt.s32.totalorder %s11, 3
      %p99 = pnand %p97, %p98
      %p100 = pneg %p99
      // Predicated region
      $region9: #{tpu_custom_call.1} parent=5 // pred_check
        _
      $region10: #{tpu_custom_call.1} parent=5 // pred_check_branch
        %102 = sbr.rel (%p99) target = $region12
      $region11: #{tpu_custom_call.1} parent=5 // pred_region
        %s103 = ssub.s32 %s11, 1
      $region12: #{tpu_custom_call.1} parent=5 // pred_fallthru
        _
      %p104 = scmp.lt.s32.totalorder %s11, 2
      // Predicated region
      $region13: #{tpu_custom_call.1} parent=5 // pred_check
        %p105 = pneg %p104
      $region14: #{tpu_custom_call.1} parent=5 // pred_check_branch
        %107 = sbr.rel (%p105) target = $region16
      $region15: #{tpu_custom_call.1} parent=5 // pred_region
        // Predicated region
        $region17: #{tpu_custom_call.1} parent=15 // pred_check
          %p108 = pneg %p31
        $region18: #{tpu_custom_call.1} parent=15 // pred_check_branch
          %110 = sbr.rel (%p108) target = $region20
        $region19: #{tpu_custom_call.1} parent=15 // pred_region
          %p111 = scmp.lt.s32.totalorder %s11, 1
          %s112 = scalar_select %p111, %s11, 1
          %s113 = smul.addr %s112, 2
          %s114 = smul.addr %s113, 8
          %s115 = scalar_lea.vmem %s0, %s114
        $region20: #{tpu_custom_call.1} parent=15 // pred_fallthru
          _
        // Predicated region
        $region21: #{tpu_custom_call.1} parent=15 // pred_check
          %p116 = pneg %p57
        $region22: #{tpu_custom_call.1} parent=15 // pred_check_branch
          %118 = sbr.rel (%p116) target = $region24
        $region23: #{tpu_custom_call.1} parent=15 // pred_region
          %p119 = scmp.lt.s32.totalorder %s11, 124
          %s120 = scalar_select %p119, %s11, 124
          %s121 = smul.addr %s120, 8
          %s122 = scalar_lea.vmem %s1, %s121
        $region24: #{tpu_custom_call.1} parent=15 // pred_fallthru
          _
      $region16: #{tpu_custom_call.1} parent=5 // pred_fallthru
        _
      %p123 = scmp.le.s32.totalorder 1, %s11
      %p124 = scmp.lt.s32.totalorder %s11, 3
      %p125 = pnand %p123, %p124
      %p126 = pneg %p125
      // Predicated region
      $region25: #{tpu_custom_call.1} parent=5 // pred_check
        _
      $region26: #{tpu_custom_call.1} parent=5 // pred_check_branch
        %128 = sbr.rel (%p125) target = $region28
      $region27: #{tpu_custom_call.1} parent=5 // pred_region
        %s129 = ssub.s32 %s11, 1
        %p130 = scmp.lt.s32.totalorder %s16, 1
        %s131 = scalar_select %p130, %s16, 1
        %s132 = smul.addr %s131, 2
        %s133 = smul.addr %s132, 8
        %s134 = scalar_lea.vmem %s0, %s133
        %p135 = pneg %p37
        %p136 = pneg %p34
        %p137 = scmp.lt.s32.totalorder %s16, 124
        %s138 = scalar_select %p137, %s16, 124
        %s139 = smul.addr %s138, 8
        %s140 = scalar_lea.vmem %s1, %s139
        %p141 = pneg %p63
        %p142 = pneg %p60
        %p143 = pneg %p89
        %p144 = pneg %p86
        %s145 = sand.u32 %s76, 1
        %s146 = scalar_lea.sflag [#allocation3], %s145
        %s147 = sand.u32 %s76, 1
        %s148 = smul.addr %s147, 16
        %s149 = scalar_lea.vmem [#allocation2], %s148
        %p150 = scmp.lt.s32.totalorder %s16, 1
        %s151 = scalar_select %p150, %s16, 1
        %s152 = smul.addr %s151, 2
        %s153 = smul.addr %s152, 8
        %s154 = scalar_lea.vmem %s0, %s153
        %p155 = scmp.lt.s32.totalorder %s16, 124
        %s156 = scalar_select %p155, %s16, 124
        %s157 = smul.addr %s156, 8
        %s158 = scalar_lea.vmem %s1, %s157
        %v159 = vld [vmem:[%s158] sm:$0xff]
        %v160 = vld [vmem:[%s154] sm:$0xff]
        %v161 = vld [vmem:[%s154 + $0x8] sm:$0xff]
        %163 = vrot.lane.b32.xlu0 %v159, 64
        %v164 = vpop.permute.xlu0 %163
        %vm166 = vcmask 523264
        %v167 = vsel %vm166, %v159, %v164
        %v168 = vadd.f32 %v160, %v167
        %v169 = vadd.f32 %v161, %v167
        %170 = vst [vmem:[%s149] sm:$0xff] %v168
        %171 = vst [vmem:[%s149 + $0x8] sm:$0xff] %v169
        %s172 = sand.u32 %s76, 1
        %s173 = scalar_lea.sflag [#allocation3], %s172
        %s174 = sand.u32 %s76, 1
        %s175 = smul.addr %s174, 16
        %s176 = scalar_lea.vmem [#allocation2], %s175
        // Predicated region
        $region29: #{tpu_custom_call.1} parent=27 // pred_check
          %p177 = pneg %p86
        $region30: #{tpu_custom_call.1} parent=27 // pred_check_branch
          %179 = sbr.rel (%p177) target = $region32
        $region31: #{tpu_custom_call.1} parent=27 // pred_region
          %s181 = ssub.s32 256, 256
          %182 = vsyncadd %s173, %s181
          %s183 = smul.addr %s16, 2
          %s184 = smul.addr %s183, 128
          %s185 = scalar_lea.hbm %s2, %s184
          %s187 = sshll.u32 %s176, 4
          %s188 = int_to_ptr.vmem [resolvable:$true] %s187
          %190 = dma.vmem_to_hbm [thread:$0]  %s188, 256, %s185, %s173
        $region32: #{tpu_custom_call.1} parent=27 // pred_fallthru
          _
      $region28: #{tpu_custom_call.1} parent=5 // pred_fallthru
        _
      %p191 = scmp.le.s32.totalorder 2, %s11
      // Predicated region
      $region33: #{tpu_custom_call.1} parent=5 // pred_check
        %p192 = pneg %p191
      $region34: #{tpu_custom_call.1} parent=5 // pred_check_branch
        %194 = sbr.rel (%p192) target = $region36
      $region35: #{tpu_custom_call.1} parent=5 // pred_region
        %s195 = ssub.s32 %s11, 2
        // Predicated region
        $region37: #{tpu_custom_call.1} parent=35 // pred_check
          %p196 = pneg %p92
        $region38: #{tpu_custom_call.1} parent=35 // pred_check_branch
          %198 = sbr.rel (%p196) target = $region40
        $region39: #{tpu_custom_call.1} parent=35 // pred_region
          %s199 = sand.u32 %s77, 1
          %s200 = scalar_lea.sflag [#allocation3], %s199
          %s201 = sand.u32 %s77, 1
          %s202 = smul.addr %s201, 16
          %s203 = scalar_lea.vmem [#allocation2], %s202
          %204 = dma.done %s200, 256
        $region40: #{tpu_custom_call.1} parent=35 // pred_fallthru
          _
      $region36: #{tpu_custom_call.1} parent=5 // pred_fallthru
        _
    $region6: #{tpu_custom_call.1} parent=1 // loop_footer
      %s15 = sadd.s32 1, %s11
    $region7: #{tpu_custom_call.1} parent=1 // loop_footer_branch
      %10 = sbr.rel target = $region3
    $region8: #{tpu_custom_call.1} parent=1 // loop_exit
      _
    %205 = vsyncpa [#allocation3], 1
    %s206 = scalar_lea.sflag [#allocation3], 1
    %207 = vsyncpa %s206, 1

</llo_original>
